<compile_context>
chip_gen: v6e
topology: v6e:2x2x1
jax: 0.10.0
libtpu: 0.0.40
codegen_flags: <defaults>
</compile_context>

<pallas_src>
import jax
import jax.numpy as jnp
from jax.experimental import pallas as pl
from jax.experimental.pallas import tpu as pltpu

LANES = 128


def sgnet_kernel(g_ref, x_ref, w1_ref, b1_ref, w2_ref, b2_ref, o_ref):
    g = g_ref[...]            # (N, N)      bf16
    x = x_ref[...]            # (N, C_in)   bf16

    # ---- layer 1: ReLU((G @ X) @ W1 + b1)  [reassociated: G-matmul width = C_in] ----
    gx = jnp.dot(g, x, preferred_element_type=jnp.float32)                  # (N, C_in) f32
    z1 = jnp.dot(gx.astype(jnp.bfloat16), w1_ref[...],
                 preferred_element_type=jnp.float32)                        # (N, H)    f32
    h1 = jnp.maximum(z1 + b1_ref[...], 0.0)                                 # f32 epilogue

    # ---- layer 2: ReLU((G @ H1) @ W2 + b2) [reassociated: G-matmul width = hid] ----
    gh = jnp.dot(g, h1.astype(jnp.bfloat16),
                 preferred_element_type=jnp.float32)                        # (N, H)    f32
    z2 = jnp.dot(gh.astype(jnp.bfloat16), w2_ref[...],
                 preferred_element_type=jnp.float32)                        # (N, 128)  f32
    h2 = jnp.maximum(z2 + b2_ref[...], 0.0)

    o_ref[...] = h2.astype(o_ref.dtype)                                     # lane-dense store


def sgnet_forward(X, G, params):
    """X: (B, N, C_in) or (N, C_in); G: (B, N, N) or (N, N)."""
    w1, b1, w2, b2 = params
    squeeze = X.ndim == 2
    if squeeze:
        X, G = X[None], G[None]
    B, N, _ = X.shape
    H = w1.shape[1]
    C_out = w2.shape[1]
    C_pad = ((C_out + LANES - 1) // LANES) * LANES

    # bf16 MXU operands; biases stay f32 (accumulation & epilogue are f32).
    Gb = G.astype(jnp.bfloat16)
    Xb = X.astype(jnp.bfloat16)
    W1b = w1.astype(jnp.bfloat16)
    b1f = b1.astype(jnp.float32)
    # Zero-pad layer-2 weight/bias to a 128-lane output slab.
    W2p = jnp.zeros((H, C_pad), jnp.bfloat16).at[:, :C_out].set(w2.astype(jnp.bfloat16))
    b2p = jnp.zeros((1, C_pad), jnp.float32).at[:, :C_out].set(b2.astype(jnp.float32))

    # Batched operands: leading batch dim squeezed out of the kernel view.
    batched = lambda shape: pl.BlockSpec(
        (None,) + shape[1:], lambda b: (b,) + (0,) * (len(shape) - 1))
    # Shared operands (weights/biases): same block for every grid step (stays resident).
    shared = lambda shape: pl.BlockSpec(shape, lambda b: (0,) * len(shape))

    out = pl.pallas_call(
        sgnet_kernel,
        out_shape=jax.ShapeDtypeStruct((B, N, C_pad), jnp.float32),
        grid=(B,),
        in_specs=[
            batched(Gb.shape),
            batched(Xb.shape),
            shared(W1b.shape),
            shared(b1f.shape),
            shared(W2p.shape),
            shared(b2p.shape),
        ],
        out_specs=batched((B, N, C_pad)),
        compiler_params=pltpu.CompilerParams(
            dimension_semantics=("parallel",)),
    )(Gb, Xb, W1b, b1f, W2p, b2p)

    out = out[:, :, :C_out]
    if squeeze:
        out = out[0]
    return out


def init_params(key, in_channels, hid_channels, out_channels):
    k1, k2, k3, k4 = jax.random.split(key, 4)
    w1 = jax.random.normal(k1, (in_channels, hid_channels), jnp.float32) * (
        1.0 / jnp.sqrt(in_channels))
    b1 = 0.01 * jax.random.normal(k2, (1, hid_channels), jnp.float32)
    w2 = jax.random.normal(k3, (hid_channels, out_channels), jnp.float32) * (
        1.0 / jnp.sqrt(hid_channels))
    b2 = 0.01 * jax.random.normal(k4, (1, out_channels), jnp.float32)
    return (w1, b1, w2, b2)


def reference_forward_f32(X, G, params):
    """Pure-f32, original association: ReLU(G @ (X @ W) + b), twice."""
    w1, b1, w2, b2 = params
    h = jnp.maximum(G @ (X @ w1) + b1, 0.0)
    h = jnp.maximum(G @ (h @ w2) + b2, 0.0)
    return h


def reference_forward_bf16(X, G, params):
    """Pure-JAX reference emulating the kernel's bf16-operand / f32-accum math."""
    w1, b1, w2, b2 = params
    bf = lambda a: a.astype(jnp.bfloat16)
    dot = lambda a, b: jnp.dot(a, b, preferred_element_type=jnp.float32)
    gx = dot(bf(G), bf(X))
    h1 = jnp.maximum(dot(bf(gx), bf(w1)) + b1, 0.0)
    gh = dot(bf(G), bf(h1))
    h2 = jnp.maximum(dot(bf(gh), bf(w2)) + b2, 0.0)
    return h2


if __name__ == "__main__":
    key = jax.random.PRNGKey(0)
    k_x, k_g, k_p = jax.random.split(key, 3)

    # Small shapes implied by the module: a batch of graphs with N nodes.
    B = 2
    N = 8             # number of graph nodes ("seq")
    in_channels = 4
    hid_channels = 32
    out_channels = 16

    X = jax.random.normal(k_x, (B, N, in_channels), jnp.float32)
    # Row-normalized random adjacency as the propagation matrix G.
    A = jax.random.uniform(k_g, (B, N, N), jnp.float32)
    G = A / jnp.sum(A, axis=2, keepdims=True)

    params = init_params(k_p, in_channels, hid_channels, out_channels)

    out = sgnet_forward(X, G, params)
    out = jax.block_until_ready(out)
    assert out.shape == (B, N, out_channels)

    ref_bf16 = jax.vmap(lambda x, g: reference_forward_bf16(x, g, params))(X, G)
    ref_f32 = jax.vmap(lambda x, g: reference_forward_f32(x, g, params))(X, G)
    assert jnp.allclose(out, ref_bf16, atol=1e-2, rtol=1e-2), "mismatch vs bf16 reference"
    assert jnp.allclose(out, ref_f32, atol=5e-2, rtol=5e-2), "mismatch vs f32 reference"

    print("KERNEL_OK")
</pallas_src>

<mosaic_0001>
module attributes {stable_mosaic.version = 11 : i64} {
  func.func @sgnet_kernel(%arg0: i32, %arg1: memref<1x8x8xbf16, #tpu.memory_space<vmem>>, %arg2: memref<1x8x4xbf16, #tpu.memory_space<vmem>>, %arg3: memref<4x32xbf16, #tpu.memory_space<vmem>>, %arg4: memref<1x32xf32, #tpu.memory_space<vmem>>, %arg5: memref<32x128xbf16, #tpu.memory_space<vmem>>, %arg6: memref<1x128xf32, #tpu.memory_space<vmem>>, %arg7: memref<1x8x128xf32, #tpu.memory_space<vmem>>) attributes {dimension_semantics = [#tpu.dimension_semantics<parallel>], iteration_bounds = array<i64: 2>, scalar_prefetch = 0 : i64, scratch_operands = 0 : i64, tpu.core_type = #tpu.core_type<tc>, window_params = [{transform_indices = @transform_0, window_bounds = array<i64: 1, 8, 8>}, {transform_indices = @transform_1, window_bounds = array<i64: 1, 8, 4>}, {pipeline_mode = #tpu.pipeline_mode<synchronous>, transform_indices = @transform_2, window_bounds = array<i64: 4, 32>}, {pipeline_mode = #tpu.pipeline_mode<synchronous>, transform_indices = @transform_3, window_bounds = array<i64: 1, 32>}, {pipeline_mode = #tpu.pipeline_mode<synchronous>, transform_indices = @transform_4, window_bounds = array<i64: 32, 128>}, {pipeline_mode = #tpu.pipeline_mode<synchronous>, transform_indices = @transform_5, window_bounds = array<i64: 1, 128>}, {transform_indices = @transform_6, window_bounds = array<i64: 1, 8, 128>}]} {
    %c0 = arith.constant 0 : index
    %c0_0 = arith.constant 0 : index
    %c0_1 = arith.constant 0 : index
    %0 = vector.load %arg1[%c0, %c0_0, %c0_1] : memref<1x8x8xbf16, #tpu.memory_space<vmem>>, vector<1x8x8xbf16>
    %1 = vector.shape_cast %0 : vector<1x8x8xbf16> to vector<8x8xbf16>
    %c0_2 = arith.constant 0 : index
    %c0_3 = arith.constant 0 : index
    %c0_4 = arith.constant 0 : index
    %2 = vector.load %arg2[%c0_2, %c0_3, %c0_4] : memref<1x8x4xbf16, #tpu.memory_space<vmem>>, vector<1x8x4xbf16>
    %3 = vector.shape_cast %2 : vector<1x8x4xbf16> to vector<8x4xbf16>
    %cst = arith.constant dense<0.000000e+00> : vector<8x4xf32>
    %4 = tpu.matmul %1, %3, %cst {dimension_numbers = #tpu.dot_dimension_numbers<[1], [0], [0], [1], [0, 0, 1, 1], [], []>} : vector<8x8xbf16>, vector<8x4xbf16>, vector<8x4xf32> -> vector<8x4xf32>
    %5 = arith.truncf %4 : vector<8x4xf32> to vector<8x4xbf16>
    %c0_5 = arith.constant 0 : index
    %c0_6 = arith.constant 0 : index
    %6 = vector.load %arg3[%c0_5, %c0_6] : memref<4x32xbf16, #tpu.memory_space<vmem>>, vector<4x32xbf16>
    %cst_7 = arith.constant dense<0.000000e+00> : vector<8x32xf32>
    %7 = tpu.matmul %5, %6, %cst_7 {dimension_numbers = #tpu.dot_dimension_numbers<[1], [0], [0], [1], [0, 0, 1, 1], [], []>} : vector<8x4xbf16>, vector<4x32xbf16>, vector<8x32xf32> -> vector<8x32xf32>
    %c0_8 = arith.constant 0 : index
    %c0_9 = arith.constant 0 : index
    %8 = vector.load %arg4[%c0_8, %c0_9] : memref<1x32xf32, #tpu.memory_space<vmem>>, vector<1x32xf32>
    %9 = vector.broadcast %8 : vector<1x32xf32> to vector<8x32xf32>
    %10 = arith.addf %7, %9 : vector<8x32xf32>
    %cst_10 = arith.constant 0.000000e+00 : f32
    %11 = vector.broadcast %cst_10 : f32 to vector<8x32xf32>
    %12 = arith.maximumf %10, %11 : vector<8x32xf32>
    %13 = arith.truncf %12 : vector<8x32xf32> to vector<8x32xbf16>
    %cst_11 = arith.constant dense<0.000000e+00> : vector<8x32xf32>
    %14 = tpu.matmul %1, %13, %cst_11 {dimension_numbers = #tpu.dot_dimension_numbers<[1], [0], [0], [1], [0, 0, 1, 1], [], []>} : vector<8x8xbf16>, vector<8x32xbf16>, vector<8x32xf32> -> vector<8x32xf32>
    %15 = arith.truncf %14 : vector<8x32xf32> to vector<8x32xbf16>
    %c0_12 = arith.constant 0 : index
    %c0_13 = arith.constant 0 : index
    %16 = vector.load %arg5[%c0_12, %c0_13] : memref<32x128xbf16, #tpu.memory_space<vmem>>, vector<32x128xbf16>
    %cst_14 = arith.constant dense<0.000000e+00> : vector<8x128xf32>
    %17 = tpu.matmul %15, %16, %cst_14 {dimension_numbers = #tpu.dot_dimension_numbers<[1], [0], [0], [1], [0, 0, 1, 1], [], []>} : vector<8x32xbf16>, vector<32x128xbf16>, vector<8x128xf32> -> vector<8x128xf32>
    %c0_15 = arith.constant 0 : index
    %c0_16 = arith.constant 0 : index
    %18 = vector.load %arg6[%c0_15, %c0_16] : memref<1x128xf32, #tpu.memory_space<vmem>>, vector<1x128xf32>
    %19 = vector.broadcast %18 : vector<1x128xf32> to vector<8x128xf32>
    %20 = arith.addf %17, %19 : vector<8x128xf32>
    %cst_17 = arith.constant 0.000000e+00 : f32
    %21 = vector.broadcast %cst_17 : f32 to vector<8x128xf32>
    %22 = arith.maximumf %20, %21 : vector<8x128xf32>
    %c0_18 = arith.constant 0 : index
    %c0_19 = arith.constant 0 : index
    %c0_20 = arith.constant 0 : index
    %23 = vector.load %arg7[%c0_18, %c0_19, %c0_20] : memref<1x8x128xf32, #tpu.memory_space<vmem>>, vector<1x8x128xf32>
    %24 = vector.shape_cast %23 : vector<1x8x128xf32> to vector<8x128xf32>
    %25 = vector.shape_cast %22 : vector<8x128xf32> to vector<1x8x128xf32>
    tpu.vector_store %arg7[%c0_18, %c0_19, %c0_20], %25 {strides = array<i32>} : memref<1x8x128xf32, #tpu.memory_space<vmem>>, vector<1x8x128xf32>,
    return
  }
  func.func @transform_0(%arg0: i32) -> (i32, i32, i32) {
    %c0_i32 = arith.constant 0 : i32
    %c0_i32_0 = arith.constant 0 : i32
    %c0_i32_1 = arith.constant 0 : i32
    return %arg0, %c0_i32, %c0_i32_0 : i32, i32, i32
  }
  func.func @transform_1(%arg0: i32) -> (i32, i32, i32) {
    %c0_i32 = arith.constant 0 : i32
    %c0_i32_0 = arith.constant 0 : i32
    %c0_i32_1 = arith.constant 0 : i32
    return %arg0, %c0_i32, %c0_i32_0 : i32, i32, i32
  }
  func.func @transform_2(%arg0: i32) -> (i32, i32) {
    %c0_i32 = arith.constant 0 : i32
    %c0_i32_0 = arith.constant 0 : i32
    %c0_i32_1 = arith.constant 0 : i32
    return %c0_i32, %c0_i32_0 : i32, i32
  }
  func.func @transform_3(%arg0: i32) -> (i32, i32) {
    %c0_i32 = arith.constant 0 : i32
    %c0_i32_0 = arith.constant 0 : i32
    %c0_i32_1 = arith.constant 0 : i32
    return %c0_i32, %c0_i32_0 : i32, i32
  }
  func.func @transform_4(%arg0: i32) -> (i32, i32) {
    %c0_i32 = arith.constant 0 : i32
    %c0_i32_0 = arith.constant 0 : i32
    %c0_i32_1 = arith.constant 0 : i32
    return %c0_i32, %c0_i32_0 : i32, i32
  }
  func.func @transform_5(%arg0: i32) -> (i32, i32) {
    %c0_i32 = arith.constant 0 : i32
    %c0_i32_0 = arith.constant 0 : i32
    %c0_i32_1 = arith.constant 0 : i32
    return %c0_i32, %c0_i32_0 : i32, i32
  }
  func.func @transform_6(%arg0: i32) -> (i32, i32, i32) {
    %c0_i32 = arith.constant 0 : i32
    %c0_i32_0 = arith.constant 0 : i32
    %c0_i32_1 = arith.constant 0 : i32
    return %arg0, %c0_i32, %c0_i32_0 : i32, i32, i32
  }
}

</mosaic_0001>

<llo_original>
// kernel: tpu_custom_call.1
$region0: #{tpu_custom_call.1}
  #allocation0 [shape = 'u32[]', space=smem, size = 0x4, offset = 0x4, fixed_abs, tag = 'smem constant byte address 0x4 - core index']
  #allocation1 [shape = 'u32[144,128]{1,0:T(1,128)}', space=vmem, size = 0x12000, scoped, tag = 'internal scratch']
  %s0 = inlined_call_operand.hbm [shape: bf16[2,8,8], index: 0, kind: input, shape index: {}]
  %s1 = inlined_call_operand.vmem [shape: bf16[2,8,4], index: 1, kind: input, shape index: {}]
  %s2 = inlined_call_operand.vmem [shape: bf16[4,32], index: 2, kind: input, shape index: {}]
  %s3 = inlined_call_operand.vmem [shape: f32[1,32], index: 3, kind: input, shape index: {}]
  %s4 = inlined_call_operand.vmem [shape: bf16[32,128], index: 4, kind: input, shape index: {}]
  %s5 = inlined_call_operand.vmem [shape: f32[1,128], index: 5, kind: input, shape index: {}]
  %s6 = inlined_call_operand.hbm [shape: f32[2,8,128], index: 6, kind: output, shape index: {}]
  %s7 = sld [smem:[#allocation0]]
  $region61: #{tpu_custom_call.1} parent=0
    _
  %s9 = ssub.s32 1, %s7
  %s10 = scalar_select 0, %s9, %s7
  $region1: #{tpu_custom_call.1} parent=0
    #allocation2 [shape = 'u8[4096]{0}', space=vmem, size = 0x1000, scoped, tag = 'input window, operand 0']
    #allocation3 [shape = 's32[2]{0}', space=sflag, size = 0x8, scoped, tag = 'scoped memory for tpu_custom_call.1']
    #allocation4 [shape = 's32[2]{0}', space=sflag, size = 0x8, scoped, tag = 'scoped memory for tpu_custom_call.1']
    #allocation5 [shape = 'u8[8192]{0}', space=vmem, size = 0x2000, scoped, tag = 'output window, operand 0']
    %11 = vsyncpa [#allocation3], 0
    %s12 = scalar_lea.sflag [#allocation3], 1
    %13 = vsyncpa %s12, 0
    %14 = vsyncpa [#allocation4], 0
    %s15 = scalar_lea.sflag [#allocation4], 1
    %16 = vsyncpa %s15, 0
    loop: start=0, step=1, limit=4
    $region2: #{tpu_custom_call.1} parent=1 // loop_pre_header
      _
    $region3: #{tpu_custom_call.1} parent=1 // loop_header
      %s18 = sphi 0, %s22
      %p19 = scmp.ge.s32.totalorder %s18, 4
      %s28 = sphi 0, %s30
      %s31 = sphi 0, %s28
      %s32 = sphi 0, %s31
      %s48 = sphi 0, %s32
      %s54 = sphi 0, %s56
      %s57 = sphi 0, %s54
      %s58 = sphi 0, %s57
      %s74 = sphi 0, %s58
      %s78 = sphi 0, %s78
      %s80 = sphi 0, %s78
      %s81 = sphi 0, %s80
      %s95 = sphi 0, %s81
      %s99 = sphi 0, %s99
      %s101 = sphi 0, %s99
      %s102 = sphi 0, %s101
      %s116 = sphi 0, %s102
      %s120 = sphi 0, %s120
      %s122 = sphi 0, %s120
      %s123 = sphi 0, %s122
      %s137 = sphi 0, %s123
      %s141 = sphi 0, %s141
      %s143 = sphi 0, %s141
      %s144 = sphi 0, %s143
      %s158 = sphi 0, %s144
      %s164 = sphi 0, %s166
      %s167 = sphi 0, %s164
      %s168 = sphi 0, %s167
      %s184 = sphi 0, %s168
    $region4: #{tpu_custom_call.1} parent=1 // loop_header_branch
      %21 = sbr.rel (%p19) target = $region8
    $region5: #{tpu_custom_call.1} parent=1 // loop_body
      %s23 = ssub.s32 %s18, 1
      %s24 = ssub.s32 %s18, 2
      %s25 = sadd.s32 %s18, 1
      %s26 = ssub.s32 %s18, %s25
      %p27 = scmp.eq.s32.totalorder %s26, 0
      %s29 = sadd.s32 %s28, 1
      %s30 = scalar_select %p27, %s28, %s29
      %p33 = pneg %p27
      %p34 = scmp.eq.s32.totalorder %s18, 1
      %p35 = por %p33, %p34
      %p36 = scmp.ne.s32.totalorder %s28, %s31
      %p37 = scmp.eq.s32.totalorder %s18, 0
      %p38 = por %p36, %p37
      %p39 = scmp.ne.s32.totalorder %s28, %s31
      %p40 = scmp.eq.s32.totalorder %s23, 1
      %p41 = por %p39, %p40
      %p42 = scmp.ne.s32.totalorder %s31, %s32
      %p43 = scmp.eq.s32.totalorder %s23, 0
      %p44 = por %p42, %p43
      %p45 = scmp.ne.s32.totalorder %s31, %s32
      %p46 = scmp.eq.s32.totalorder %s24, 1
      %p47 = por %p45, %p46
      %p49 = scmp.ne.s32.totalorder %s32, %s48
      %p50 = scmp.eq.s32.totalorder %s24, 0
      %p51 = por %p49, %p50
      %s52 = ssub.s32 %s18, %s25
      %p53 = scmp.eq.s32.totalorder %s52, 0
      %s55 = sadd.s32 %s54, 1
      %s56 = scalar_select %p53, %s54, %s55
      %p59 = pneg %p53
      %p60 = scmp.eq.s32.totalorder %s18, 1
      %p61 = por %p59, %p60
      %p62 = scmp.ne.s32.totalorder %s54, %s57
      %p63 = scmp.eq.s32.totalorder %s18, 0
      %p64 = por %p62, %p63
      %p65 = scmp.ne.s32.totalorder %s54, %s57
      %p66 = scmp.eq.s32.totalorder %s23, 1
      %p67 = por %p65, %p66
      %p68 = scmp.ne.s32.totalorder %s57, %s58
      %p69 = scmp.eq.s32.totalorder %s23, 0
      %p70 = por %p68, %p69
      %p71 = scmp.ne.s32.totalorder %s57, %s58
      %p72 = scmp.eq.s32.totalorder %s24, 1
      %p73 = por %p71, %p72
      %p75 = scmp.ne.s32.totalorder %s58, %s74
      %p76 = scmp.eq.s32.totalorder %s24, 0
      %p77 = por %p75, %p76
      %s79 = sadd.s32 %s78, 1
      %p82 = scmp.eq.s32.totalorder %s18, 1
      %p83 = scmp.ne.s32.totalorder %s78, %s80
      %p84 = scmp.eq.s32.totalorder %s18, 0
      %p85 = por %p83, %p84
      %p86 = scmp.ne.s32.totalorder %s78, %s80
      %p87 = scmp.eq.s32.totalorder %s23, 1
      %p88 = por %p86, %p87
      %p89 = scmp.ne.s32.totalorder %s80, %s81
      %p90 = scmp.eq.s32.totalorder %s23, 0
      %p91 = por %p89, %p90
      %p92 = scmp.ne.s32.totalorder %s80, %s81
      %p93 = scmp.eq.s32.totalorder %s24, 1
      %p94 = por %p92, %p93
      %p96 = scmp.ne.s32.totalorder %s81, %s95
      %p97 = scmp.eq.s32.totalorder %s24, 0
      %p98 = por %p96, %p97
      %s100 = sadd.s32 %s99, 1
      %p103 = scmp.eq.s32.totalorder %s18, 1
      %p104 = scmp.ne.s32.totalorder %s99, %s101
      %p105 = scmp.eq.s32.totalorder %s18, 0
      %p106 = por %p104, %p105
      %p107 = scmp.ne.s32.totalorder %s99, %s101
      %p108 = scmp.eq.s32.totalorder %s23, 1
      %p109 = por %p107, %p108
      %p110 = scmp.ne.s32.totalorder %s101, %s102
      %p111 = scmp.eq.s32.totalorder %s23, 0
      %p112 = por %p110, %p111
      %p113 = scmp.ne.s32.totalorder %s101, %s102
      %p114 = scmp.eq.s32.totalorder %s24, 1
      %p115 = por %p113, %p114
      %p117 = scmp.ne.s32.totalorder %s102, %s116
      %p118 = scmp.eq.s32.totalorder %s24, 0
      %p119 = por %p117, %p118
      %s121 = sadd.s32 %s120, 1
      %p124 = scmp.eq.s32.totalorder %s18, 1
      %p125 = scmp.ne.s32.totalorder %s120, %s122
      %p126 = scmp.eq.s32.totalorder %s18, 0
      %p127 = por %p125, %p126
      %p128 = scmp.ne.s32.totalorder %s120, %s122
      %p129 = scmp.eq.s32.totalorder %s23, 1
      %p130 = por %p128, %p129
      %p131 = scmp.ne.s32.totalorder %s122, %s123
      %p132 = scmp.eq.s32.totalorder %s23, 0
      %p133 = por %p131, %p132
      %p134 = scmp.ne.s32.totalorder %s122, %s123
      %p135 = scmp.eq.s32.totalorder %s24, 1
      %p136 = por %p134, %p135
      %p138 = scmp.ne.s32.totalorder %s123, %s137
      %p139 = scmp.eq.s32.totalorder %s24, 0
      %p140 = por %p138, %p139
      %s142 = sadd.s32 %s141, 1
      %p145 = scmp.eq.s32.totalorder %s18, 1
      %p146 = scmp.ne.s32.totalorder %s141, %s143
      %p147 = scmp.eq.s32.totalorder %s18, 0
      %p148 = por %p146, %p147
      %p149 = scmp.ne.s32.totalorder %s141, %s143
      %p150 = scmp.eq.s32.totalorder %s23, 1
      %p151 = por %p149, %p150
      %p152 = scmp.ne.s32.totalorder %s143, %s144
      %p153 = scmp.eq.s32.totalorder %s23, 0
      %p154 = por %p152, %p153
      %p155 = scmp.ne.s32.totalorder %s143, %s144
      %p156 = scmp.eq.s32.totalorder %s24, 1
      %p157 = por %p155, %p156
      %p159 = scmp.ne.s32.totalorder %s144, %s158
      %p160 = scmp.eq.s32.totalorder %s24, 0
      %p161 = por %p159, %p160
      %s162 = ssub.s32 %s18, %s25
      %p163 = scmp.eq.s32.totalorder %s162, 0
      %s165 = sadd.s32 %s164, 1
      %s166 = scalar_select %p163, %s164, %s165
      %p169 = pneg %p163
      %p170 = scmp.eq.s32.totalorder %s18, 1
      %p171 = por %p169, %p170
      %p172 = scmp.ne.s32.totalorder %s164, %s167
      %p173 = scmp.eq.s32.totalorder %s18, 0
      %p174 = por %p172, %p173
      %p175 = scmp.ne.s32.totalorder %s164, %s167
      %p176 = scmp.eq.s32.totalorder %s23, 1
      %p177 = por %p175, %p176
      %p178 = scmp.ne.s32.totalorder %s167, %s168
      %p179 = scmp.eq.s32.totalorder %s23, 0
      %p180 = por %p178, %p179
      %p181 = scmp.ne.s32.totalorder %s167, %s168
      %p182 = scmp.eq.s32.totalorder %s24, 1
      %p183 = por %p181, %p182
      %p185 = scmp.ne.s32.totalorder %s168, %s184
      %p186 = scmp.eq.s32.totalorder %s24, 0
      %p187 = por %p185, %p186
      %p188 = scmp.le.s32.totalorder 1, %s18
      %p189 = scmp.lt.s32.totalorder %s18, 3
      %p190 = pnand %p188, %p189
      %p191 = pneg %p190
      // Predicated region
      $region9: #{tpu_custom_call.1} parent=5 // pred_check
        _
      $region10: #{tpu_custom_call.1} parent=5 // pred_check_branch
        %193 = sbr.rel (%p190) target = $region12
      $region11: #{tpu_custom_call.1} parent=5 // pred_region
        %s194 = ssub.s32 %s18, 1
        // Predicated region
        $region13: #{tpu_custom_call.1} parent=11 // pred_check
          %p195 = pneg %p91
        $region14: #{tpu_custom_call.1} parent=11 // pred_check_branch
          %197 = sbr.rel (%p195) target = $region16
        $region15: #{tpu_custom_call.1} parent=11 // pred_region
          _
        $region16: #{tpu_custom_call.1} parent=11 // pred_fallthru
          _
        // Predicated region
        $region17: #{tpu_custom_call.1} parent=11 // pred_check
          %p198 = pneg %p112
        $region18: #{tpu_custom_call.1} parent=11 // pred_check_branch
          %200 = sbr.rel (%p198) target = $region20
        $region19: #{tpu_custom_call.1} parent=11 // pred_region
          _
        $region20: #{tpu_custom_call.1} parent=11 // pred_fallthru
          _
        // Predicated region
        $region21: #{tpu_custom_call.1} parent=11 // pred_check
          %p201 = pneg %p133
        $region22: #{tpu_custom_call.1} parent=11 // pred_check_branch
          %203 = sbr.rel (%p201) target = $region24
        $region23: #{tpu_custom_call.1} parent=11 // pred_region
          _
        $region24: #{tpu_custom_call.1} parent=11 // pred_fallthru
          _
        // Predicated region
        $region25: #{tpu_custom_call.1} parent=11 // pred_check
          %p204 = pneg %p154
        $region26: #{tpu_custom_call.1} parent=11 // pred_check_branch
          %206 = sbr.rel (%p204) target = $region28
        $region27: #{tpu_custom_call.1} parent=11 // pred_region
          _
        $region28: #{tpu_custom_call.1} parent=11 // pred_fallthru
          _
      $region12: #{tpu_custom_call.1} parent=5 // pred_fallthru
        _
      %p207 = scmp.lt.s32.totalorder %s18, 2
      // Predicated region
      $region29: #{tpu_custom_call.1} parent=5 // pred_check
        %p208 = pneg %p207
      $region30: #{tpu_custom_call.1} parent=5 // pred_check_branch
        %210 = sbr.rel (%p208) target = $region32
      $region31: #{tpu_custom_call.1} parent=5 // pred_region
        // Predicated region
        $region33: #{tpu_custom_call.1} parent=31 // pred_check
          %p211 = pneg %p38
        $region34: #{tpu_custom_call.1} parent=31 // pred_check_branch
          %213 = sbr.rel (%p211) target = $region36
        $region35: #{tpu_custom_call.1} parent=31 // pred_region
          %s214 = sand.u32 %s28, 1
          %s215 = scalar_lea.sflag [#allocation3], %s214
          %s216 = sand.u32 %s28, 1
          %s217 = smul.addr %s216, 4
          %s218 = scalar_lea.vmem [#allocation2], %s217
          %s220 = ssub.s32 64, 64
          %221 = vsyncadd %s215, %s220
          %s222 = smul.addr %s18, 64
          %s223 = scalar_lea.hbm %s0, %s222
          %s225 = sshll.u32 %s218, 4
          %s226 = int_to_ptr.vmem [resolvable:$true] %s225
          %228 = dma.hbm_to_vmem [thread:$0]  %s223, 64, %s226, %s215
        $region36: #{tpu_custom_call.1} parent=31 // pred_fallthru
          _
        // Predicated region
        $region37: #{tpu_custom_call.1} parent=31 // pred_check
          %p229 = pneg %p64
        $region38: #{tpu_custom_call.1} parent=31 // pred_check_branch
          %231 = sbr.rel (%p229) target = $region40
        $region39: #{tpu_custom_call.1} parent=31 // pred_region
          %p232 = scmp.lt.s32.totalorder %s18, 1
          %s233 = scalar_select %p232, %s18, 1
          %s234 = smul.addr %s233, 4
          %s235 = scalar_lea.vmem %s1, %s234
        $region40: #{tpu_custom_call.1} parent=31 // pred_fallthru
          _
      $region32: #{tpu_custom_call.1} parent=5 // pred_fallthru
        _
      %p236 = scmp.le.s32.totalorder 1, %s18
      %p237 = scmp.lt.s32.totalorder %s18, 3
      %p238 = pnand %p236, %p237
      %p239 = pneg %p238
      // Predicated region
      $region41: #{tpu_custom_call.1} parent=5 // pred_check
        _
      $region42: #{tpu_custom_call.1} parent=5 // pred_check_branch
        %241 = sbr.rel (%p238) target = $region44
      $region43: #{tpu_custom_call.1} parent=5 // pred_region
        %s242 = ssub.s32 %s18, 1
        %s243 = sand.u32 %s31, 1
        %s244 = scalar_lea.sflag [#allocation3], %s243
        %s245 = sand.u32 %s31, 1
        %s246 = smul.addr %s245, 4
        %s247 = scalar_lea.vmem [#allocation2], %s246
        // Predicated region
        $region45: #{tpu_custom_call.1} parent=43 // pred_check
          %p248 = pneg %p44
        $region46: #{tpu_custom_call.1} parent=43 // pred_check_branch
          %250 = sbr.rel (%p248) target = $region48
        $region47: #{tpu_custom_call.1} parent=43 // pred_region
          %251 = dma.done %s244, 64
        $region48: #{tpu_custom_call.1} parent=43 // pred_fallthru
          _
        %s252 = sand.u32 %s31, 1
        %s253 = scalar_lea.sflag [#allocation3], %s252
        %s254 = sand.u32 %s31, 1
        %s255 = smul.addr %s254, 4
        %s256 = scalar_lea.vmem [#allocation2], %s255
        %p257 = pneg %p44
        %p258 = pneg %p41
        %p259 = scmp.lt.s32.totalorder %s23, 1
        %s260 = scalar_select %p259, %s23, 1
        %s261 = smul.addr %s260, 4
        %s262 = scalar_lea.vmem %s1, %s261
        %p263 = pneg %p70
        %p264 = pneg %p67
        %p265 = pneg %p91
        %p266 = pneg %p88
        %p267 = pneg %p112
        %p268 = pneg %p109
        %p269 = pneg %p133
        %p270 = pneg %p130
        %p271 = pneg %p154
        %p272 = pneg %p151
        %p273 = pneg %p180
        %p274 = pneg %p177
        %s275 = sand.u32 %s167, 1
        %s276 = scalar_lea.sflag [#allocation4], %s275
        %s277 = sand.u32 %s167, 1
        %s278 = smul.addr %s277, 8
        %s279 = scalar_lea.vmem [#allocation5], %s278
        %p280 = scmp.lt.s32.totalorder %s23, 1
        %s281 = scalar_select %p280, %s23, 1
        %s282 = smul.addr %s281, 4
        %s283 = scalar_lea.vmem %s1, %s282
        %v285 = vld [vmem:[%s247] sm:$0xf]
        %v286 = vld [vmem:[%s283] sm:$0xf]
        %vm287 = vcmask 64512
        %v289 = vsel %vm287, %v285, 0
        %vm291 = vcmask 1043456
        %v293 = vsel %vm291, %v286, 0
        %295 = vmatprep.subr.bf16.mxu0 0
        %296 = vmatpush1.bf16.msra.mxu0 0
        %297 = vmatprep.subr.bf16.mxu0 0
        %298 = vmatpush1.bf16.msra.mxu0 0
        %299 = vmatprep.subr.bf16.mxu0 0
        %300 = vmatpush1.bf16.msra.mxu0 0
        %301 = vmatprep.subr.bf16.mxu0 0
        %302 = vmatpush1.bf16.msra.mxu0 0
        %303 = vmatprep.subr.bf16.mxu0 0
        %304 = vmatpush1.bf16.msra.mxu0 0
        %305 = vmatprep.subr.bf16.mxu0 0
        %306 = vmatpush1.bf16.msra.mxu0 0
        %307 = vmatprep.subr.bf16.mxu0 0
        %308 = vmatpush1.bf16.msra.mxu0 0
        %309 = vmatprep.subr.bf16.mxu0 0
        %310 = vmatpush1.bf16.msra.mxu0 %v293
        %311 = vmatprep.subr.bf16.mxu0 0
        %312 = vmatpush2.bf16.msra.mxu0 0
        %313 = vmatprep.subr.bf16.mxu0 0
        %314 = vmatpush2.bf16.msra.mxu0 0
        %315 = vmatprep.subr.bf16.mxu0 0
        %316 = vmatpush2.bf16.msra.mxu0 0
        %317 = vmatprep.subr.bf16.mxu0 0
        %318 = vmatpush2.bf16.msra.mxu0 0
        %319 = vmatprep.subr.bf16.mxu0 0
        %320 = vmatpush2.bf16.msra.mxu0 0
        %321 = vmatprep.subr.bf16.mxu0 0
        %322 = vmatpush2.bf16.msra.mxu0 0
        %323 = vmatprep.subr.bf16.mxu0 0
        %324 = vmatpush2.bf16.msra.mxu0 0
        %325 = vmatprep.subr.bf16.mxu0 0
        %326 = vmatpush2.bf16.msra.mxu0 0
        %327 = vmatprep.mubr.bf16.mxu0 0
        %328 = vmatmul.mubr.bf16.gmra.mxu0 %v289
        %v329 = vpop.f32.mrf.mxu0
        %v330 = vadd.f32 0.0, %v329
        %v331 = vpop.f32.mrf.mxu0
        %v332 = vpop.f32.mrf.mxu0
        %v333 = vpop.f32.mrf.mxu0
        %334 = vdwg.mxu0
        %v335 = vpack.c.bf16 %v330, %v330
        %v336 = vld [vmem:[%s2] sm:$0x3]
        %v337 = vld [vmem:[%s3] sm:$0x1]
        %v339 = vlaneseq
        %v340 = vshrl.u32 %v339, 7
        %v341 = vsub.s32 0, %v340
        %v342 = vrot.slane %v337, %v341
        %vm344 = vcmask 31744
        %v346 = vsel %vm344, %v335, 0
        %vm348 = vcmask 1041408
        %v350 = vsel %vm348, %v336, 0
        %352 = vmatprep.subr.bf16.mxu0 0
        %353 = vmatpush1.bf16.msra.mxu0 0
        %354 = vmatprep.subr.bf16.mxu0 0
        %355 = vmatpush1.bf16.msra.mxu0 0
        %356 = vmatprep.subr.bf16.mxu0 0
        %357 = vmatpush1.bf16.msra.mxu0 0
        %358 = vmatprep.subr.bf16.mxu0 0
        %359 = vmatpush1.bf16.msra.mxu0 0
        %360 = vmatprep.subr.bf16.mxu0 0
        %361 = vmatpush1.bf16.msra.mxu0 0
        %362 = vmatprep.subr.bf16.mxu0 0
        %363 = vmatpush1.bf16.msra.mxu0 0
        %364 = vmatprep.subr.bf16.mxu0 0
        %365 = vmatpush1.bf16.msra.mxu0 0
        %366 = vmatprep.subr.bf16.mxu0 0
        %367 = vmatpush1.bf16.msra.mxu0 %v350
        %368 = vmatprep.subr.bf16.mxu0 0
        %369 = vmatpush2.bf16.msra.mxu0 0
        %370 = vmatprep.subr.bf16.mxu0 0
        %371 = vmatpush2.bf16.msra.mxu0 0
        %372 = vmatprep.subr.bf16.mxu0 0
        %373 = vmatpush2.bf16.msra.mxu0 0
        %374 = vmatprep.subr.bf16.mxu0 0
        %375 = vmatpush2.bf16.msra.mxu0 0
        %376 = vmatprep.subr.bf16.mxu0 0
        %377 = vmatpush2.bf16.msra.mxu0 0
        %378 = vmatprep.subr.bf16.mxu0 0
        %379 = vmatpush2.bf16.msra.mxu0 0
        %380 = vmatprep.subr.bf16.mxu0 0
        %381 = vmatpush2.bf16.msra.mxu0 0
        %382 = vmatprep.subr.bf16.mxu0 0
        %383 = vmatpush2.bf16.msra.mxu0 0
        %384 = vmatprep.mubr.bf16.mxu0 0
        %385 = vmatmul.mubr.bf16.gmra.mxu0 %v346
        %v386 = vpop.f32.mrf.mxu0
        %v387 = vadd.f32 %v342, %v386
        %v388 = vpop.f32.mrf.mxu0
        %v389 = vpop.f32.mrf.mxu0
        %v390 = vpop.f32.mrf.mxu0
        %391 = vdwg.mxu0
        %v392 = vmax.f32 %v387, 0.0
        %v393 = vpack.c.bf16 %v392, %v392
        %v395 = vsel %vm291, %v393, 0
        %397 = vmatprep.subr.bf16.mxu0 0
        %398 = vmatpush1.bf16.msra.mxu0 0
        %399 = vmatprep.subr.bf16.mxu0 0
        %400 = vmatpush1.bf16.msra.mxu0 0
        %401 = vmatprep.subr.bf16.mxu0 0
        %402 = vmatpush1.bf16.msra.mxu0 0
        %403 = vmatprep.subr.bf16.mxu0 0
        %404 = vmatpush1.bf16.msra.mxu0 0
        %405 = vmatprep.subr.bf16.mxu0 0
        %406 = vmatpush1.bf16.msra.mxu0 0
        %407 = vmatprep.subr.bf16.mxu0 0
        %408 = vmatpush1.bf16.msra.mxu0 0
        %409 = vmatprep.subr.bf16.mxu0 0
        %410 = vmatpush1.bf16.msra.mxu0 0
        %411 = vmatprep.subr.bf16.mxu0 0
        %412 = vmatpush1.bf16.msra.mxu0 %v395
        %413 = vmatprep.subr.bf16.mxu0 0
        %414 = vmatpush2.bf16.msra.mxu0 0
        %415 = vmatprep.subr.bf16.mxu0 0
        %416 = vmatpush2.bf16.msra.mxu0 0
        %417 = vmatprep.subr.bf16.mxu0 0
        %418 = vmatpush2.bf16.msra.mxu0 0
        %419 = vmatprep.subr.bf16.mxu0 0
        %420 = vmatpush2.bf16.msra.mxu0 0
        %421 = vmatprep.subr.bf16.mxu0 0
        %422 = vmatpush2.bf16.msra.mxu0 0
        %423 = vmatprep.subr.bf16.mxu0 0
        %424 = vmatpush2.bf16.msra.mxu0 0
        %425 = vmatprep.subr.bf16.mxu0 0
        %426 = vmatpush2.bf16.msra.mxu0 0
        %427 = vmatprep.subr.bf16.mxu0 0
        %428 = vmatpush2.bf16.msra.mxu0 0
        %429 = vmatprep.mubr.bf16.mxu0 0
        %430 = vmatmul.mubr.bf16.gmra.mxu0 %v289
        %v431 = vpop.f32.mrf.mxu0
        %v432 = vadd.f32 0.0, %v431
        %v433 = vpop.f32.mrf.mxu0
        %v434 = vpop.f32.mrf.mxu0
        %v435 = vpop.f32.mrf.mxu0
        %436 = vdwg.mxu0
        %v437 = vpack.c.bf16 %v432, %v432
        %v438 = vld [vmem:[%s4] sm:$0xf]
        %v439 = vld [vmem:[%s4 + $0x4] sm:$0xf]
        %v440 = vld [vmem:[%s4 + $0x8] sm:$0xf]
        %v441 = vld [vmem:[%s4 + $0xc] sm:$0xf]
        %v442 = vld [vmem:[%s5] sm:$0x1]
        %v444 = vlaneseq
        %v445 = vshrl.u32 %v444, 7
        %v446 = vsub.s32 0, %v445
        %v447 = vrot.slane %v442, %v446
        %v453 = vunpack.c.l.b16 %v438
        %v454 = vunpack.c.l.b16 %v439
        %v455 = vunpack.c.l.b16 %v440
        %v456 = vunpack.c.l.b16 %v441
        %v457 = vpack.c.b16 %v454, %v453
        %v458 = vpack.c.b16 %v456, %v455
        %vm461 = vcmask 261120
        %v463 = vsel %vm461, %v437, 0
        %465 = vmatprep.subr.bf16.mxu0 0
        %466 = vmatpush1.bf16.msra.mxu0 0
        %467 = vmatprep.subr.bf16.mxu0 0
        %468 = vmatpush1.bf16.msra.mxu0 0
        %469 = vmatprep.subr.bf16.mxu0 0
        %470 = vmatpush1.bf16.msra.mxu0 0
        %471 = vmatprep.subr.bf16.mxu0 0
        %472 = vmatpush1.bf16.msra.mxu0 0
        %473 = vmatprep.subr.bf16.mxu0 0
        %474 = vmatpush1.bf16.msra.mxu0 0
        %475 = vmatprep.subr.bf16.mxu0 0
        %476 = vmatpush1.bf16.msra.mxu0 0
        %477 = vmatprep.subr.bf16.mxu0 0
        %478 = vmatpush1.bf16.msra.mxu0 %v458
        %479 = vmatprep.subr.bf16.mxu0 0
        %480 = vmatpush1.bf16.msra.mxu0 %v457
        %481 = vmatprep.subr.bf16.mxu0 0
        %482 = vmatpush2.bf16.msra.mxu0 0
        %483 = vmatprep.subr.bf16.mxu0 0
        %484 = vmatpush2.bf16.msra.mxu0 0
        %485 = vmatprep.subr.bf16.mxu0 0
        %486 = vmatpush2.bf16.msra.mxu0 0
        %487 = vmatprep.subr.bf16.mxu0 0
        %488 = vmatpush2.bf16.msra.mxu0 0
        %489 = vmatprep.subr.bf16.mxu0 0
        %490 = vmatpush2.bf16.msra.mxu0 0
        %491 = vmatprep.subr.bf16.mxu0 0
        %492 = vmatpush2.bf16.msra.mxu0 0
        %493 = vmatprep.subr.bf16.mxu0 0
        %494 = vmatpush2.bf16.msra.mxu0 0
        %495 = vmatprep.subr.bf16.mxu0 0
        %496 = vmatpush2.bf16.msra.mxu0 0
        %497 = vmatprep.mubr.bf16.mxu0 0
        %498 = vmatmul.mubr.bf16.gmra.mxu0 %v463
        %v499 = vpop.f32.mrf.mxu0
        %v500 = vadd.f32 %v447, %v499
        %v501 = vpop.f32.mrf.mxu0
        %v502 = vpop.f32.mrf.mxu0
        %v503 = vpop.f32.mrf.mxu0
        %504 = vdwg.mxu0
        %v505 = vmax.f32 %v500, 0.0
        %506 = vst [vmem:[%s279] sm:$0xff] %v505
        %s507 = sand.u32 %s167, 1
        %s508 = scalar_lea.sflag [#allocation4], %s507
        %s509 = sand.u32 %s167, 1
        %s510 = smul.addr %s509, 8
        %s511 = scalar_lea.vmem [#allocation5], %s510
        // Predicated region
        $region49: #{tpu_custom_call.1} parent=43 // pred_check
          %p512 = pneg %p177
        $region50: #{tpu_custom_call.1} parent=43 // pred_check_branch
          %514 = sbr.rel (%p512) target = $region52
        $region51: #{tpu_custom_call.1} parent=43 // pred_region
          %s516 = ssub.s32 128, 128
          %517 = vsyncadd %s508, %s516
          %s518 = smul.addr %s23, 128
          %s519 = scalar_lea.hbm %s6, %s518
          %s521 = sshll.u32 %s511, 4
          %s522 = int_to_ptr.vmem [resolvable:$true] %s521
          %524 = dma.vmem_to_hbm [thread:$0]  %s522, 128, %s519, %s508
        $region52: #{tpu_custom_call.1} parent=43 // pred_fallthru
          _
      $region44: #{tpu_custom_call.1} parent=5 // pred_fallthru
        _
      %p525 = scmp.le.s32.totalorder 2, %s18
      // Predicated region
      $region53: #{tpu_custom_call.1} parent=5 // pred_check
        %p526 = pneg %p525
      $region54: #{tpu_custom_call.1} parent=5 // pred_check_branch
        %528 = sbr.rel (%p526) target = $region56
      $region55: #{tpu_custom_call.1} parent=5 // pred_region
        %s529 = ssub.s32 %s18, 2
        // Predicated region
        $region57: #{tpu_custom_call.1} parent=55 // pred_check
          %p530 = pneg %p183
        $region58: #{tpu_custom_call.1} parent=55 // pred_check_branch
          %532 = sbr.rel (%p530) target = $region60
        $region59: #{tpu_custom_call.1} parent=55 // pred_region
          %s533 = sand.u32 %s168, 1
          %s534 = scalar_lea.sflag [#allocation4], %s533
          %s535 = sand.u32 %s168, 1
          %s536 = smul.addr %s535, 8
          %s537 = scalar_lea.vmem [#allocation5], %s536
          %538 = dma.done %s534, 128
        $region60: #{tpu_custom_call.1} parent=55 // pred_fallthru
          _
      $region56: #{tpu_custom_call.1} parent=5 // pred_fallthru
        _
    $region6: #{tpu_custom_call.1} parent=1 // loop_footer
      %s22 = sadd.s32 1, %s18
    $region7: #{tpu_custom_call.1} parent=1 // loop_footer_branch
      %17 = sbr.rel target = $region3
    $region8: #{tpu_custom_call.1} parent=1 // loop_exit
      _
    %539 = vsyncpa [#allocation3], 1
    %s540 = scalar_lea.sflag [#allocation3], 1
    %541 = vsyncpa %s540, 1
    %542 = vsyncpa [#allocation4], 1
    %s543 = scalar_lea.sflag [#allocation4], 1
    %544 = vsyncpa %s543, 1

</llo_original>
